<compile_context>
chip_gen: v7x
topology: tpu7x:2x2x1
jax: 0.10.0
libtpu: 0.0.40
codegen_flags: <defaults>
</compile_context>

<pallas_src>
import jax
import jax.numpy as jnp
from jax.experimental import pallas as pl
from jax.experimental.pallas import tpu as pltpu

LN_EPS = 1e-12              # BERT-style LayerNorm eps
_INV_SQRT2 = 0.7071067811865476


def _gelu_layernorm(y, b, g, beta):
    """f32 epilogue on a (tm, H) tile: bias + exact GELU + LayerNorm."""
    y = y + b
    # Exact (erf) GELU — matches torch.nn.GELU default.
    # TODO(synk): if profiling shows the VALU slot saturated by the erf
    # polynomial, switch to the tanh approximation (routes work to the EUP).
    y = 0.5 * y * (1.0 + jax.lax.erf(y * _INV_SQRT2))
    mean = jnp.mean(y, axis=-1, keepdims=True)
    centered = y - mean
    var = jnp.mean(centered * centered, axis=-1, keepdims=True)
    yn = centered * jax.lax.rsqrt(var + LN_EPS)
    return yn * g + beta


def _head_kernel_resident(x_ref, w_ref, b_ref, g_ref, beta_ref, o_ref):
    # x_ref: (tm, H) row tile; w_ref: (H, H) resident weight (single-buffered);
    # b/g/beta: (1, H) f32. MXU accumulates in f32; epilogue runs in f32.
    y = jnp.dot(x_ref[...], w_ref[...], preferred_element_type=jnp.float32)
    out = _gelu_layernorm(y, b_ref[...], g_ref[...], beta_ref[...])
    o_ref[...] = out.astype(o_ref.dtype)


def _head_kernel_ktiled(x_ref, w_ref, b_ref, g_ref, beta_ref, o_ref, acc_ref):
    # x_ref: (tm, tk) tile; w_ref: (tk, H) weight K-slab; acc_ref: (tm, H) f32.
    k = pl.program_id(1)

    @pl.when(k == 0)
    def _init():
        acc_ref[...] = jnp.zeros_like(acc_ref)

    acc_ref[...] += jnp.dot(x_ref[...], w_ref[...],
                            preferred_element_type=jnp.float32)

    @pl.when(k == pl.num_programs(1) - 1)
    def _finalize():
        out = _gelu_layernorm(acc_ref[...], b_ref[...], g_ref[...], beta_ref[...])
        o_ref[...] = out.astype(o_ref.dtype)


def _round_up(x, m):
    return ((x + m - 1) // m) * m


def _vmem_capacity_bytes():
    try:
        return int(pltpu.get_tpu_info().vmem_capacity_bytes)
    except Exception:
        return 128 << 20  # v5e/v6e physical VMEM; conservative fallback


def flexbert_prediction_head(hidden_states, w, b, gamma, beta, *,
                             tm=512, tk=512,
                             force_ktiled=False, matmul_dtype=None):
    """FlexBertPredictionHead forward.

    hidden_states: [M, H] (M = batch*seq).
    w: [H, H] in (in, out) layout — i.e. torch nn.Linear.weight.T.
    b, gamma, beta: [H].
    matmul_dtype: optional dtype (e.g. jnp.bfloat16) to feed the MXU with;
      accumulation/epilogue stay f32. Numerics-affecting; default None.
    """
    M, H = hidden_states.shape
    out_dtype = hidden_states.dtype

    x = hidden_states
    if matmul_dtype is not None:
        x = x.astype(matmul_dtype)
        w = w.astype(matmul_dtype)

    x_itemsize = jnp.dtype(x.dtype).itemsize
    w_itemsize = jnp.dtype(w.dtype).itemsize
    out_itemsize = jnp.dtype(out_dtype).itemsize

    # Sublane pack of the row tile: 8 rows/vreg for 4B dtypes, 16 bf16, 32 int8.
    pack = max(8, 32 // x_itemsize)
    vmem_cap = _vmem_capacity_bytes()

    # ---- row tile ------------------------------------------------------
    m_rounded = _round_up(M, pack)
    align = 256 if m_rounded >= 256 else pack        # MXU-aligned tiles for large M
    tm_eff = max(pack, min(_round_up(tm, align), m_rounded))
    # Keep both v7x TensorCores busy: if everything fits a single row tile,
    # split it so the "parallel" grid axis has >= 2 programs.
    if m_rounded <= tm_eff and M > pack and tm_eff >= 2 * pack:
        tm_eff = _round_up(tm_eff // 2, pack)
    m_pad = _round_up(M, tm_eff)
    if m_pad != M:
        x = jnp.pad(x, ((0, m_pad - M), (0, 0)))

    # Params pre-cast to f32 (kernel skips per-step astype).
    b2 = b.astype(jnp.float32).reshape(1, H)
    g2 = gamma.astype(jnp.float32).reshape(1, H)
    beta2 = beta.astype(jnp.float32).reshape(1, H)

    # ---- choose resident-weight vs K-tiled path --------------------------
    est_resident = (
        H * H * w_itemsize                  # resident weight (single-buffered)
        + 2 * tm_eff * H * x_itemsize       # x tiles, double-buffered
        + 2 * tm_eff * H * out_itemsize     # out tiles, double-buffered
        + 6 * tm_eff * H * 4                # f32 epilogue temporaries headroom
        + 8 * H * 4                         # bias / gamma / beta
    )
    use_ktiled = force_ktiled or est_resident > int(0.8 * vmem_cap)

    cost = pl.CostEstimate(
        flops=2 * m_pad * H * H,
        transcendentals=m_pad * H,
        bytes_accessed=(m_pad * H * x_itemsize + H * H * w_itemsize
                        + 3 * H * 4 + m_pad * H * out_itemsize),
    )

    if not use_ktiled:
        vmem_limit = min(max(int(1.25 * est_resident), 16 << 20),
                         int(0.9 * vmem_cap))
        out = pl.pallas_call(
            _head_kernel_resident,
            out_shape=jax.ShapeDtypeStruct((m_pad, H), out_dtype),
            grid_spec=pltpu.PrefetchScalarGridSpec(
                num_scalar_prefetch=0,
                grid=(m_pad // tm_eff,),
                in_specs=[
                    pl.BlockSpec((tm_eff, H), lambda i: (i, 0)),   # x row tile
                    pl.BlockSpec((H, H), lambda i: (0, 0),
                                 pipeline_mode=pl.Buffered(1)),    # resident weight
                    pl.BlockSpec((1, H), lambda i: (0, 0)),        # bias (f32)
                    pl.BlockSpec((1, H), lambda i: (0, 0)),        # ln gamma (f32)
                    pl.BlockSpec((1, H), lambda i: (0, 0)),        # ln beta (f32)
                ],
                out_specs=pl.BlockSpec((tm_eff, H), lambda i: (i, 0)),
            ),
            compiler_params=pltpu.CompilerParams(
                dimension_semantics=("parallel",),
                vmem_limit_bytes=vmem_limit,
            ),
            cost_estimate=cost,
        )(x, w, b2, g2, beta2)
        return out[:M] if m_pad != M else out

    # ---- K-tiled path (large H / small-VMEM chips) -----------------------
    if H <= tk:
        tk_eff = H
    elif H % tk == 0:
        tk_eff = tk
    else:
        tk_eff = next((c for c in (512, 384, 256, 128)
                       if c <= tk and H % c == 0), tk)
    k_pad = _round_up(H, tk_eff)
    xk, wk = x, w
    if k_pad != H:   # zero-pad contraction dim (zeros contribute nothing)
        xk = jnp.pad(xk, ((0, 0), (0, k_pad - H)))
        wk = jnp.pad(wk, ((0, k_pad - H), (0, 0)))

    est_ktiled = (
        2 * tk_eff * H * w_itemsize         # weight K-slabs, double-buffered
        + 2 * tm_eff * tk_eff * x_itemsize  # x tiles, double-buffered
        + 2 * tm_eff * H * out_itemsize     # out tiles, double-buffered
        + tm_eff * H * 4                    # f32 accumulator scratch
        + 6 * tm_eff * H * 4                # f32 epilogue temporaries headroom
        + 8 * H * 4
    )
    vmem_limit = min(max(int(1.25 * est_ktiled), 16 << 20), int(0.9 * vmem_cap))

    out = pl.pallas_call(
        _head_kernel_ktiled,
        out_shape=jax.ShapeDtypeStruct((m_pad, H), out_dtype),
        grid_spec=pltpu.PrefetchScalarGridSpec(
            num_scalar_prefetch=0,
            grid=(m_pad // tm_eff, k_pad // tk_eff),
            in_specs=[
                pl.BlockSpec((tm_eff, tk_eff), lambda i, k: (i, k)),  # x tile
                pl.BlockSpec((tk_eff, H), lambda i, k: (k, 0)),       # weight K-slab
                pl.BlockSpec((1, H), lambda i, k: (0, 0)),            # bias
                pl.BlockSpec((1, H), lambda i, k: (0, 0)),            # ln gamma
                pl.BlockSpec((1, H), lambda i, k: (0, 0)),            # ln beta
            ],
            out_specs=pl.BlockSpec((tm_eff, H), lambda i, k: (i, 0)),
            scratch_shapes=[pltpu.VMEM((tm_eff, H), jnp.float32)],
        ),
        compiler_params=pltpu.CompilerParams(
            dimension_semantics=("parallel", "arbitrary"),
            vmem_limit_bytes=vmem_limit,
        ),
        cost_estimate=cost,
    )(xk, wk, b2, g2, beta2)
    return out[:M] if m_pad != M else out


def _reference(hidden_states, w, b, gamma, beta):
    x = hidden_states.astype(jnp.float32)
    y = x @ w.astype(jnp.float32) + b.astype(jnp.float32)
    y = 0.5 * y * (1.0 + jax.lax.erf(y / jnp.sqrt(2.0)))
    mean = jnp.mean(y, axis=-1, keepdims=True)
    var = jnp.mean((y - mean) ** 2, axis=-1, keepdims=True)
    yn = (y - mean) * jax.lax.rsqrt(var + LN_EPS)
    return (yn * gamma + beta).astype(hidden_states.dtype)


if __name__ == "__main__":
    batch, seq, hidden = 2, 8, 32
    M = batch * seq

    key = jax.random.PRNGKey(0)
    k_x, k_w, k_b, k_g, k_beta = jax.random.split(key, 5)

    # Deterministic synthetic params (nn.Linear(hidden, hidden) + LayerNorm(hidden))
    x = jax.random.normal(k_x, (M, hidden), dtype=jnp.float32)
    w = jax.random.normal(k_w, (hidden, hidden), dtype=jnp.float32) * 0.02   # [in, out]
    b = jax.random.normal(k_b, (hidden,), dtype=jnp.float32) * 0.02
    gamma = jnp.ones((hidden,), dtype=jnp.float32) + 0.01 * jax.random.normal(k_g, (hidden,))
    beta = 0.01 * jax.random.normal(k_beta, (hidden,), dtype=jnp.float32)

    # Resident-weight path.
    out = jax.block_until_ready(flexbert_prediction_head(x, w, b, gamma, beta))
    ref = _reference(x, w, b, gamma, beta)
    assert out.shape == (M, hidden)
    assert jnp.allclose(out, ref, atol=1e-4, rtol=1e-4), "mismatch vs reference"

    # Ragged row count — exercises pad/slice + two-core tile split.
    M2 = 13
    out2 = jax.block_until_ready(flexbert_prediction_head(x[:M2], w, b, gamma, beta))
    ref2 = _reference(x[:M2], w, b, gamma, beta)
    assert out2.shape == (M2, hidden)
    assert jnp.allclose(out2, ref2, atol=1e-4, rtol=1e-4), "mismatch vs reference (ragged)"

    # K-tiled accumulator path (used automatically for large H / small VMEM;
    # forced here at a small shape so it is exercised in the test).
    H3, M3 = 256, 24
    k3a, k3b, k3c, _ = jax.random.split(jax.random.PRNGKey(0), 4)
    x3 = jax.random.normal(k3a, (M3, H3), dtype=jnp.float32)
    w3 = jax.random.normal(k3b, (H3, H3), dtype=jnp.float32) * 0.02
    b3 = jax.random.normal(k3c, (H3,), dtype=jnp.float32) * 0.02
    g3 = jnp.ones((H3,), dtype=jnp.float32)
    bt3 = jnp.zeros((H3,), dtype=jnp.float32)
    out3 = jax.block_until_ready(
        flexbert_prediction_head(x3, w3, b3, g3, bt3, force_ktiled=True, tk=128))
    ref3 = _reference(x3, w3, b3, g3, bt3)
    assert out3.shape == (M3, H3)
    assert jnp.allclose(out3, ref3, atol=1e-4, rtol=1e-4), "mismatch vs reference (k-tiled)"

    print("KERNEL_OK")
</pallas_src>

<mosaic_0001>
module attributes {stable_mosaic.version = 11 : i64} {
  func.func @_head_kernel_resident(%arg0: i32, %arg1: memref<8x32xf32, #tpu.memory_space<vmem>>, %arg2: memref<32x32xf32, #tpu.memory_space<vmem>>, %arg3: memref<1x32xf32, #tpu.memory_space<vmem>>, %arg4: memref<1x32xf32, #tpu.memory_space<vmem>>, %arg5: memref<1x32xf32, #tpu.memory_space<vmem>>, %arg6: memref<8x32xf32, #tpu.memory_space<vmem>>) attributes {dimension_semantics = [#tpu.dimension_semantics<parallel>], iteration_bounds = array<i64: 2>, scalar_prefetch = 0 : i64, scratch_operands = 0 : i64, tpu.core_type = #tpu.core_type<tc>, window_params = [{transform_indices = @transform_0, window_bounds = array<i64: 8, 32>}, {pipeline_mode = #tpu.pipeline_mode<synchronous>, transform_indices = @transform_1, window_bounds = array<i64: 32, 32>}, {pipeline_mode = #tpu.pipeline_mode<synchronous>, transform_indices = @transform_2, window_bounds = array<i64: 1, 32>}, {pipeline_mode = #tpu.pipeline_mode<synchronous>, transform_indices = @transform_3, window_bounds = array<i64: 1, 32>}, {pipeline_mode = #tpu.pipeline_mode<synchronous>, transform_indices = @transform_4, window_bounds = array<i64: 1, 32>}, {transform_indices = @transform_5, window_bounds = array<i64: 8, 32>}]} {
    %c0 = arith.constant 0 : index
    %c0_0 = arith.constant 0 : index
    %0 = vector.load %arg1[%c0, %c0_0] : memref<8x32xf32, #tpu.memory_space<vmem>>, vector<8x32xf32>
    %c0_1 = arith.constant 0 : index
    %c0_2 = arith.constant 0 : index
    %1 = vector.load %arg2[%c0_1, %c0_2] : memref<32x32xf32, #tpu.memory_space<vmem>>, vector<32x32xf32>
    %cst = arith.constant dense<0.000000e+00> : vector<8x32xf32>
    %2 = tpu.matmul %0, %1, %cst {dimension_numbers = #tpu.dot_dimension_numbers<[1], [0], [0], [1], [0, 0, 1, 1], [], []>} : vector<8x32xf32>, vector<32x32xf32>, vector<8x32xf32> -> vector<8x32xf32>
    %c0_3 = arith.constant 0 : index
    %c0_4 = arith.constant 0 : index
    %3 = vector.load %arg3[%c0_3, %c0_4] : memref<1x32xf32, #tpu.memory_space<vmem>>, vector<1x32xf32>
    %c0_5 = arith.constant 0 : index
    %c0_6 = arith.constant 0 : index
    %4 = vector.load %arg4[%c0_5, %c0_6] : memref<1x32xf32, #tpu.memory_space<vmem>>, vector<1x32xf32>
    %c0_7 = arith.constant 0 : index
    %c0_8 = arith.constant 0 : index
    %5 = vector.load %arg5[%c0_7, %c0_8] : memref<1x32xf32, #tpu.memory_space<vmem>>, vector<1x32xf32>
    %6 = vector.broadcast %3 : vector<1x32xf32> to vector<8x32xf32>
    %7 = arith.addf %2, %6 : vector<8x32xf32>
    %cst_9 = arith.constant 5.000000e-01 : f32
    %8 = vector.broadcast %cst_9 : f32 to vector<8x32xf32>
    %9 = arith.mulf %8, %7 : vector<8x32xf32>
    %cst_10 = arith.constant 0.707106769 : f32
    %10 = vector.broadcast %cst_10 : f32 to vector<8x32xf32>
    %11 = arith.mulf %7, %10 : vector<8x32xf32>
    %12 = math.erf %11 : vector<8x32xf32>
    %cst_11 = arith.constant 1.000000e+00 : f32
    %13 = vector.broadcast %cst_11 : f32 to vector<8x32xf32>
    %14 = arith.addf %13, %12 : vector<8x32xf32>
    %15 = arith.mulf %9, %14 : vector<8x32xf32>
    %cst_12 = arith.constant dense<0.000000e+00> : vector<8xf32>
    %16 = vector.multi_reduction <add>, %15, %cst_12 [1] : vector<8x32xf32> to vector<8xf32>
    %17 = vector.shape_cast %16 : vector<8xf32> to vector<8x1xf32>
    %cst_13 = arith.constant 3.200000e+01 : f32
    %18 = vector.broadcast %cst_13 : f32 to vector<8x1xf32>
    %19 = arith.divf %17, %18 : vector<8x1xf32>
    %20 = vector.broadcast %19 : vector<8x1xf32> to vector<8x32xf32>
    %21 = arith.subf %15, %20 : vector<8x32xf32>
    %22 = arith.mulf %21, %21 : vector<8x32xf32>
    %cst_14 = arith.constant dense<0.000000e+00> : vector<8xf32>
    %23 = vector.multi_reduction <add>, %22, %cst_14 [1] : vector<8x32xf32> to vector<8xf32>
    %24 = vector.shape_cast %23 : vector<8xf32> to vector<8x1xf32>
    %cst_15 = arith.constant 3.200000e+01 : f32
    %25 = vector.broadcast %cst_15 : f32 to vector<8x1xf32>
    %26 = arith.divf %24, %25 : vector<8x1xf32>
    %cst_16 = arith.constant 9.99999996E-13 : f32
    %27 = vector.broadcast %cst_16 : f32 to vector<8x1xf32>
    %28 = arith.addf %26, %27 : vector<8x1xf32>
    %29 = math.rsqrt %28 : vector<8x1xf32>
    %30 = vector.broadcast %29 : vector<8x1xf32> to vector<8x32xf32>
    %31 = arith.mulf %21, %30 : vector<8x32xf32>
    %32 = vector.broadcast %4 : vector<1x32xf32> to vector<8x32xf32>
    %33 = arith.mulf %31, %32 : vector<8x32xf32>
    %34 = vector.broadcast %5 : vector<1x32xf32> to vector<8x32xf32>
    %35 = arith.addf %33, %34 : vector<8x32xf32>
    %c0_17 = arith.constant 0 : index
    %c0_18 = arith.constant 0 : index
    %36 = vector.load %arg6[%c0_17, %c0_18] : memref<8x32xf32, #tpu.memory_space<vmem>>, vector<8x32xf32>
    tpu.vector_store %arg6[%c0_17, %c0_18], %35 {strides = array<i32>} : memref<8x32xf32, #tpu.memory_space<vmem>>, vector<8x32xf32>,
    return
  }
  func.func @transform_0(%arg0: i32) -> (i32, i32) {
    %c0_i32 = arith.constant 0 : i32
    %c0_i32_0 = arith.constant 0 : i32
    return %arg0, %c0_i32 : i32, i32
  }
  func.func @transform_1(%arg0: i32) -> (i32, i32) {
    %c0_i32 = arith.constant 0 : i32
    %c0_i32_0 = arith.constant 0 : i32
    %c0_i32_1 = arith.constant 0 : i32
    return %c0_i32, %c0_i32_0 : i32, i32
  }
  func.func @transform_2(%arg0: i32) -> (i32, i32) {
    %c0_i32 = arith.constant 0 : i32
    %c0_i32_0 = arith.constant 0 : i32
    %c0_i32_1 = arith.constant 0 : i32
    return %c0_i32, %c0_i32_0 : i32, i32
  }
  func.func @transform_3(%arg0: i32) -> (i32, i32) {
    %c0_i32 = arith.constant 0 : i32
    %c0_i32_0 = arith.constant 0 : i32
    %c0_i32_1 = arith.constant 0 : i32
    return %c0_i32, %c0_i32_0 : i32, i32
  }
  func.func @transform_4(%arg0: i32) -> (i32, i32) {
    %c0_i32 = arith.constant 0 : i32
    %c0_i32_0 = arith.constant 0 : i32
    %c0_i32_1 = arith.constant 0 : i32
    return %c0_i32, %c0_i32_0 : i32, i32
  }
  func.func @transform_5(%arg0: i32) -> (i32, i32) {
    %c0_i32 = arith.constant 0 : i32
    %c0_i32_0 = arith.constant 0 : i32
    return %arg0, %c0_i32 : i32, i32
  }
}

</mosaic_0001>

<llo_original>
// kernel: tpu_custom_call.1
$region0: #{tpu_custom_call.1}
  #allocation0 [shape = 'u32[]', space=smem, size = 0x4, offset = 0x4, fixed_abs, tag = 'smem constant byte address 0x4 - core index']
  #allocation1 [shape = 'u32[144,128]{1,0:T(1,128)}', space=vmem, size = 0x12000, scoped, tag = 'internal scratch']
  %s0 = inlined_call_operand.hbm [shape: f32[16,32], index: 0, kind: input, shape index: {}]
  %s1 = inlined_call_operand.hbm [shape: f32[32,32], index: 1, kind: input, shape index: {}]
  %s2 = inlined_call_operand.vmem [shape: f32[1,32], index: 2, kind: input, shape index: {}]
  %s3 = inlined_call_operand.vmem [shape: f32[1,32], index: 3, kind: input, shape index: {}]
  %s4 = inlined_call_operand.vmem [shape: f32[1,32], index: 4, kind: input, shape index: {}]
  %s5 = inlined_call_operand.hbm [shape: f32[16,32], index: 5, kind: output, shape index: {}]
  %s6 = sld [smem:[#allocation0]]
  $region61: #{tpu_custom_call.1} parent=0
    _
  %s8 = ssub.s32 1, %s6
  %s9 = scalar_select 0, %s8, %s6
  $region1: #{tpu_custom_call.1} parent=0
    #allocation2 [shape = 'u8[8192]{0}', space=vmem, size = 0x2000, scoped, tag = 'input window, operand 0']
    #allocation3 [shape = 's32[2]{0}', space=sflag, size = 0x8, scoped, tag = 'scoped memory for tpu_custom_call.1']
    #allocation4 [shape = 's32[2]{0}', space=sflag, size = 0x8, scoped, tag = 'scoped memory for tpu_custom_call.1']
    #allocation5 [shape = 'u8[16384]{0}', space=vmem, size = 0x4000, scoped, tag = 'input window, operand 1, single buffered']
    #allocation6 [shape = 's32[1]{0}', space=sflag, size = 0x4, scoped, tag = 'scoped memory for tpu_custom_call.1']
    #allocation7 [shape = 'u8[8192]{0}', space=vmem, size = 0x2000, scoped, tag = 'output window, operand 0']
    %10 = vsyncpa [#allocation3], 0
    %s11 = scalar_lea.sflag [#allocation3], 1
    %12 = vsyncpa %s11, 0
    %13 = vsyncpa [#allocation6], 0
    %14 = vsyncpa [#allocation4], 0
    %s15 = scalar_lea.sflag [#allocation4], 1
    %16 = vsyncpa %s15, 0
    loop: start=0, step=1, limit=4
    $region2: #{tpu_custom_call.1} parent=1 // loop_pre_header
      _
    $region3: #{tpu_custom_call.1} parent=1 // loop_header
      %s18 = sphi 0, %s22
      %p19 = scmp.ge.s32.totalorder %s18, 4
      %s28 = sphi 0, %s30
      %s31 = sphi 0, %s28
      %s32 = sphi 0, %s31
      %s48 = sphi 0, %s32
      %s52 = sphi 0, %s52
      %s54 = sphi 0, %s52
      %s55 = sphi 0, %s54
      %s69 = sphi 0, %s55
      %s73 = sphi 0, %s73
      %s75 = sphi 0, %s73
      %s76 = sphi 0, %s75
      %s90 = sphi 0, %s76
      %s94 = sphi 0, %s94
      %s96 = sphi 0, %s94
      %s97 = sphi 0, %s96
      %s111 = sphi 0, %s97
      %s115 = sphi 0, %s115
      %s117 = sphi 0, %s115
      %s118 = sphi 0, %s117
      %s132 = sphi 0, %s118
      %s138 = sphi 0, %s140
      %s141 = sphi 0, %s138
      %s142 = sphi 0, %s141
      %s158 = sphi 0, %s142
    $region4: #{tpu_custom_call.1} parent=1 // loop_header_branch
      %21 = sbr.rel (%p19) target = $region8
    $region5: #{tpu_custom_call.1} parent=1 // loop_body
      %s23 = ssub.s32 %s18, 1
      %s24 = ssub.s32 %s18, 2
      %s25 = sadd.s32 %s18, 1
      %s26 = ssub.s32 %s18, %s25
      %p27 = scmp.eq.s32.totalorder %s26, 0
      %s29 = sadd.s32 %s28, 1
      %s30 = scalar_select %p27, %s28, %s29
      %p33 = pneg %p27
      %p34 = scmp.eq.s32.totalorder %s18, 1
      %p35 = por %p33, %p34
      %p36 = scmp.ne.s32.totalorder %s28, %s31
      %p37 = scmp.eq.s32.totalorder %s18, 0
      %p38 = por %p36, %p37
      %p39 = scmp.ne.s32.totalorder %s28, %s31
      %p40 = scmp.eq.s32.totalorder %s23, 1
      %p41 = por %p39, %p40
      %p42 = scmp.ne.s32.totalorder %s31, %s32
      %p43 = scmp.eq.s32.totalorder %s23, 0
      %p44 = por %p42, %p43
      %p45 = scmp.ne.s32.totalorder %s31, %s32
      %p46 = scmp.eq.s32.totalorder %s24, 1
      %p47 = por %p45, %p46
      %p49 = scmp.ne.s32.totalorder %s32, %s48
      %p50 = scmp.eq.s32.totalorder %s24, 0
      %p51 = por %p49, %p50
      %s53 = sadd.s32 %s52, 1
      %p56 = scmp.eq.s32.totalorder %s18, 1
      %p57 = scmp.ne.s32.totalorder %s52, %s54
      %p58 = scmp.eq.s32.totalorder %s18, 0
      %p59 = por %p57, %p58
      %p60 = scmp.ne.s32.totalorder %s52, %s54
      %p61 = scmp.eq.s32.totalorder %s23, 1
      %p62 = por %p60, %p61
      %p63 = scmp.ne.s32.totalorder %s54, %s55
      %p64 = scmp.eq.s32.totalorder %s23, 0
      %p65 = por %p63, %p64
      %p66 = scmp.ne.s32.totalorder %s54, %s55
      %p67 = scmp.eq.s32.totalorder %s24, 1
      %p68 = por %p66, %p67
      %p70 = scmp.ne.s32.totalorder %s55, %s69
      %p71 = scmp.eq.s32.totalorder %s24, 0
      %p72 = por %p70, %p71
      %s74 = sadd.s32 %s73, 1
      %p77 = scmp.eq.s32.totalorder %s18, 1
      %p78 = scmp.ne.s32.totalorder %s73, %s75
      %p79 = scmp.eq.s32.totalorder %s18, 0
      %p80 = por %p78, %p79
      %p81 = scmp.ne.s32.totalorder %s73, %s75
      %p82 = scmp.eq.s32.totalorder %s23, 1
      %p83 = por %p81, %p82
      %p84 = scmp.ne.s32.totalorder %s75, %s76
      %p85 = scmp.eq.s32.totalorder %s23, 0
      %p86 = por %p84, %p85
      %p87 = scmp.ne.s32.totalorder %s75, %s76
      %p88 = scmp.eq.s32.totalorder %s24, 1
      %p89 = por %p87, %p88
      %p91 = scmp.ne.s32.totalorder %s76, %s90
      %p92 = scmp.eq.s32.totalorder %s24, 0
      %p93 = por %p91, %p92
      %s95 = sadd.s32 %s94, 1
      %p98 = scmp.eq.s32.totalorder %s18, 1
      %p99 = scmp.ne.s32.totalorder %s94, %s96
      %p100 = scmp.eq.s32.totalorder %s18, 0
      %p101 = por %p99, %p100
      %p102 = scmp.ne.s32.totalorder %s94, %s96
      %p103 = scmp.eq.s32.totalorder %s23, 1
      %p104 = por %p102, %p103
      %p105 = scmp.ne.s32.totalorder %s96, %s97
      %p106 = scmp.eq.s32.totalorder %s23, 0
      %p107 = por %p105, %p106
      %p108 = scmp.ne.s32.totalorder %s96, %s97
      %p109 = scmp.eq.s32.totalorder %s24, 1
      %p110 = por %p108, %p109
      %p112 = scmp.ne.s32.totalorder %s97, %s111
      %p113 = scmp.eq.s32.totalorder %s24, 0
      %p114 = por %p112, %p113
      %s116 = sadd.s32 %s115, 1
      %p119 = scmp.eq.s32.totalorder %s18, 1
      %p120 = scmp.ne.s32.totalorder %s115, %s117
      %p121 = scmp.eq.s32.totalorder %s18, 0
      %p122 = por %p120, %p121
      %p123 = scmp.ne.s32.totalorder %s115, %s117
      %p124 = scmp.eq.s32.totalorder %s23, 1
      %p125 = por %p123, %p124
      %p126 = scmp.ne.s32.totalorder %s117, %s118
      %p127 = scmp.eq.s32.totalorder %s23, 0
      %p128 = por %p126, %p127
      %p129 = scmp.ne.s32.totalorder %s117, %s118
      %p130 = scmp.eq.s32.totalorder %s24, 1
      %p131 = por %p129, %p130
      %p133 = scmp.ne.s32.totalorder %s118, %s132
      %p134 = scmp.eq.s32.totalorder %s24, 0
      %p135 = por %p133, %p134
      %s136 = ssub.s32 %s18, %s25
      %p137 = scmp.eq.s32.totalorder %s136, 0
      %s139 = sadd.s32 %s138, 1
      %s140 = scalar_select %p137, %s138, %s139
      %p143 = pneg %p137
      %p144 = scmp.eq.s32.totalorder %s18, 1
      %p145 = por %p143, %p144
      %p146 = scmp.ne.s32.totalorder %s138, %s141
      %p147 = scmp.eq.s32.totalorder %s18, 0
      %p148 = por %p146, %p147
      %p149 = scmp.ne.s32.totalorder %s138, %s141
      %p150 = scmp.eq.s32.totalorder %s23, 1
      %p151 = por %p149, %p150
      %p152 = scmp.ne.s32.totalorder %s141, %s142
      %p153 = scmp.eq.s32.totalorder %s23, 0
      %p154 = por %p152, %p153
      %p155 = scmp.ne.s32.totalorder %s141, %s142
      %p156 = scmp.eq.s32.totalorder %s24, 1
      %p157 = por %p155, %p156
      %p159 = scmp.ne.s32.totalorder %s142, %s158
      %p160 = scmp.eq.s32.totalorder %s24, 0
      %p161 = por %p159, %p160
      %p162 = scmp.le.s32.totalorder 1, %s18
      %p163 = scmp.lt.s32.totalorder %s18, 3
      %p164 = pnand %p162, %p163
      %p165 = pneg %p164
      // Predicated region
      $region9: #{tpu_custom_call.1} parent=5 // pred_check
        _
      $region10: #{tpu_custom_call.1} parent=5 // pred_check_branch
        %167 = sbr.rel (%p164) target = $region12
      $region11: #{tpu_custom_call.1} parent=5 // pred_region
        %s168 = ssub.s32 %s18, 1
        // Predicated region
        $region13: #{tpu_custom_call.1} parent=11 // pred_check
          %p169 = pneg %p65
        $region14: #{tpu_custom_call.1} parent=11 // pred_check_branch
          %171 = sbr.rel (%p169) target = $region16
        $region15: #{tpu_custom_call.1} parent=11 // pred_region
          %s173 = ssub.s32 512, 512
          %174 = vsyncadd [#allocation6], %s173
          %s175 = sshll.u32 [#allocation5], 4
          %s176 = int_to_ptr.vmem [resolvable:$true] %s175
          %181 = dma.hbm_to_vmem [thread:$0]  %s1, 512, %s176, [#allocation6], 128, 128, 8
        $region16: #{tpu_custom_call.1} parent=11 // pred_fallthru
          _
        // Predicated region
        $region17: #{tpu_custom_call.1} parent=11 // pred_check
          %p182 = pneg %p86
        $region18: #{tpu_custom_call.1} parent=11 // pred_check_branch
          %184 = sbr.rel (%p182) target = $region20
        $region19: #{tpu_custom_call.1} parent=11 // pred_region
          _
        $region20: #{tpu_custom_call.1} parent=11 // pred_fallthru
          _
        // Predicated region
        $region21: #{tpu_custom_call.1} parent=11 // pred_check
          %p185 = pneg %p107
        $region22: #{tpu_custom_call.1} parent=11 // pred_check_branch
          %187 = sbr.rel (%p185) target = $region24
        $region23: #{tpu_custom_call.1} parent=11 // pred_region
          _
        $region24: #{tpu_custom_call.1} parent=11 // pred_fallthru
          _
        // Predicated region
        $region25: #{tpu_custom_call.1} parent=11 // pred_check
          %p188 = pneg %p128
        $region26: #{tpu_custom_call.1} parent=11 // pred_check_branch
          %190 = sbr.rel (%p188) target = $region28
        $region27: #{tpu_custom_call.1} parent=11 // pred_region
          _
        $region28: #{tpu_custom_call.1} parent=11 // pred_fallthru
          _
      $region12: #{tpu_custom_call.1} parent=5 // pred_fallthru
        _
      %p191 = scmp.lt.s32.totalorder %s18, 2
      // Predicated region
      $region29: #{tpu_custom_call.1} parent=5 // pred_check
        %p192 = pneg %p191
      $region30: #{tpu_custom_call.1} parent=5 // pred_check_branch
        %194 = sbr.rel (%p192) target = $region32
      $region31: #{tpu_custom_call.1} parent=5 // pred_region
        // Predicated region
        $region33: #{tpu_custom_call.1} parent=31 // pred_check
          %p195 = pneg %p38
        $region34: #{tpu_custom_call.1} parent=31 // pred_check_branch
          %197 = sbr.rel (%p195) target = $region36
        $region35: #{tpu_custom_call.1} parent=31 // pred_region
          %s198 = sand.u32 %s28, 1
          %s199 = scalar_lea.sflag [#allocation3], %s198
          %s200 = sand.u32 %s28, 1
          %s201 = smul.addr %s200, 8
          %s202 = scalar_lea.vmem [#allocation2], %s201
          %s204 = ssub.s32 128, 128
          %205 = vsyncadd %s199, %s204
          %s206 = smul.addr %s18, 128
          %s207 = scalar_lea.hbm %s0, %s206
          %s209 = sshll.u32 %s202, 4
          %s210 = int_to_ptr.vmem [resolvable:$true] %s209
          %212 = dma.hbm_to_vmem [thread:$0]  %s207, 128, %s210, %s199
        $region36: #{tpu_custom_call.1} parent=31 // pred_fallthru
          _
      $region32: #{tpu_custom_call.1} parent=5 // pred_fallthru
        _
      %p213 = scmp.le.s32.totalorder 1, %s18
      %p214 = scmp.lt.s32.totalorder %s18, 3
      %p215 = pnand %p213, %p214
      %p216 = pneg %p215
      // Predicated region
      $region37: #{tpu_custom_call.1} parent=5 // pred_check
        _
      $region38: #{tpu_custom_call.1} parent=5 // pred_check_branch
        %218 = sbr.rel (%p215) target = $region40
      $region39: #{tpu_custom_call.1} parent=5 // pred_region
        %s219 = ssub.s32 %s18, 1
        %s220 = sand.u32 %s31, 1
        %s221 = scalar_lea.sflag [#allocation3], %s220
        %s222 = sand.u32 %s31, 1
        %s223 = smul.addr %s222, 8
        %s224 = scalar_lea.vmem [#allocation2], %s223
        // Predicated region
        $region41: #{tpu_custom_call.1} parent=39 // pred_check
          %p225 = pneg %p44
        $region42: #{tpu_custom_call.1} parent=39 // pred_check_branch
          %227 = sbr.rel (%p225) target = $region44
        $region43: #{tpu_custom_call.1} parent=39 // pred_region
          %228 = dma.done %s221, 128
        $region44: #{tpu_custom_call.1} parent=39 // pred_fallthru
          _
        // Predicated region
        $region45: #{tpu_custom_call.1} parent=39 // pred_check
          %p229 = pneg %p65
        $region46: #{tpu_custom_call.1} parent=39 // pred_check_branch
          %231 = sbr.rel (%p229) target = $region48
        $region47: #{tpu_custom_call.1} parent=39 // pred_region
          %232 = dma.done [#allocation6], 512
        $region48: #{tpu_custom_call.1} parent=39 // pred_fallthru
          _
        %s233 = sand.u32 %s31, 1
        %s234 = scalar_lea.sflag [#allocation3], %s233
        %s235 = sand.u32 %s31, 1
        %s236 = smul.addr %s235, 8
        %s237 = scalar_lea.vmem [#allocation2], %s236
        %p238 = pneg %p44
        %p239 = pneg %p41
        %p240 = pneg %p65
        %p241 = pneg %p62
        %p242 = pneg %p86
        %p243 = pneg %p83
        %p244 = pneg %p107
        %p245 = pneg %p104
        %p246 = pneg %p128
        %p247 = pneg %p125
        %p248 = pneg %p154
        %p249 = pneg %p151
        %s250 = sand.u32 %s141, 1
        %s251 = scalar_lea.sflag [#allocation4], %s250
        %s252 = sand.u32 %s141, 1
        %s253 = smul.addr %s252, 8
        %s254 = scalar_lea.vmem [#allocation7], %s253
        %v255 = vld [vmem:[%s224] sm:$0xff]
        %v256 = vld [vmem:[#allocation5] sm:$0xff]
        %v257 = vld [vmem:[#allocation5 + $0x8] sm:$0xff]
        %v258 = vld [vmem:[#allocation5 + $0x10] sm:$0xff]
        %v259 = vld [vmem:[#allocation5 + $0x18] sm:$0xff]
        %v260 = vld [vmem:[%s2] sm:$0x1]
        %v261 = vld [vmem:[%s3] sm:$0x1]
        %v262 = vld [vmem:[%s4] sm:$0x1]
        %v264 = vlaneseq
        %v265 = vshrl.u32 %v264, 7
        %v266 = vsub.s32 0, %v265
        %v267 = vrot.slane %v260, %v266
        %vm269 = vcmask 261120
        %v271 = vsel %vm269, %v255, 0
        %273 = vmatprep.subr.mxu0 0.0
        %274 = vmatpush1.msra.mxu0 %v256
        %275 = vmatprep.subr.mxu0 0.0
        %276 = vmatpush1.msra.mxu0 %v257
        %277 = vmatprep.subr.mxu0 0.0
        %278 = vmatpush1.msra.mxu0 %v258
        %279 = vmatprep.subr.mxu0 0.0
        %280 = vmatpush1.msra.mxu0 %v259
        %281 = vmatprep.subr.mxu0 0.0
        %282 = vmatpush1.msra.mxu0 0.0
        %283 = vmatprep.subr.mxu0 0.0
        %284 = vmatpush1.msra.mxu0 0.0
        %285 = vmatprep.subr.mxu0 0.0
        %286 = vmatpush1.msra.mxu0 0.0
        %287 = vmatprep.subr.mxu0 0.0
        %288 = vmatpush1.msra.mxu0 0.0
        %289 = vmatprep.subr.mxu0 0.0
        %290 = vmatpush1.msra.mxu0 0.0
        %291 = vmatprep.subr.mxu0 0.0
        %292 = vmatpush1.msra.mxu0 0.0
        %293 = vmatprep.subr.mxu0 0.0
        %294 = vmatpush1.msra.mxu0 0.0
        %295 = vmatprep.subr.mxu0 0.0
        %296 = vmatpush1.msra.mxu0 0.0
        %297 = vmatprep.subr.mxu0 0.0
        %298 = vmatpush1.msra.mxu0 0.0
        %299 = vmatprep.subr.mxu0 0.0
        %300 = vmatpush1.msra.mxu0 0.0
        %301 = vmatprep.subr.mxu0 0.0
        %302 = vmatpush1.msra.mxu0 0.0
        %303 = vmatprep.subr.mxu0 0.0
        %304 = vmatpush1.msra.mxu0 0.0
        %305 = vmatprep.subr.mxu0 0.0
        %306 = vmatpush1.msra.mxu0 0.0
        %307 = vmatprep.subr.mxu0 0.0
        %308 = vmatpush1.msra.mxu0 0.0
        %309 = vmatprep.subr.mxu0 0.0
        %310 = vmatpush1.msra.mxu0 0.0
        %311 = vmatprep.subr.mxu0 0.0
        %312 = vmatpush1.msra.mxu0 0.0
        %313 = vmatprep.subr.mxu0 0.0
        %314 = vmatpush1.msra.mxu0 0.0
        %315 = vmatprep.subr.mxu0 0.0
        %316 = vmatpush1.msra.mxu0 0.0
        %317 = vmatprep.subr.mxu0 0.0
        %318 = vmatpush1.msra.mxu0 0.0
        %319 = vmatprep.subr.mxu0 0.0
        %320 = vmatpush1.msra.mxu0 0.0
        %321 = vmatprep.subr.mxu0 0.0
        %322 = vmatpush1.msra.mxu0 0.0
        %323 = vmatprep.subr.mxu0 0.0
        %324 = vmatpush1.msra.mxu0 0.0
        %325 = vmatprep.subr.mxu0 0.0
        %326 = vmatpush1.msra.mxu0 0.0
        %327 = vmatprep.subr.mxu0 0.0
        %328 = vmatpush1.msra.mxu0 0.0
        %329 = vmatprep.subr.mxu0 0.0
        %330 = vmatpush1.msra.mxu0 0.0
        %331 = vmatprep.subr.mxu0 0.0
        %332 = vmatpush1.msra.mxu0 0.0
        %333 = vmatprep.subr.mxu0 0.0
        %334 = vmatpush1.msra.mxu0 0.0
        %335 = vmatprep.subr.mxu0 0.0
        %336 = vmatpush1.msra.mxu0 0.0
        %337 = vmatprep.mubr.f32.mxu0 0.0
        %338 = vmatmul.mubr.f32.gmra.mrb[0].mxu0 %v271
        %v339 = vpop.f32.mrb[0].mxu0
        %v340 = vadd.f32 %v267, %v339
        %v341 = vpop.f32.mrb[0].mxu0
        %342 = vdwg.mxu0
        %v343 = vmul.f32 %v340, 0.5
        %v344 = vmul.f32 %v340, 0.70710677
        %v345 = verf.f32.pop %v344
        %v346 = vadd.f32 %v345, 1.0
        %v347 = vmul.f32 %v343, %v346
        %v348 = vsel %vm269, %v347, 0.0
        %349 = vadd.xlane.f32.xlu0 %v348
        %v350 = vpop.xlane.xlu0 %349
        %v351 = vrcp.pop 32.0
        %v352 = vmul.f32 %v350, %v351
        %v353 = vsub.f32 %v347, %v352
        %v354 = vmul.f32 %v353, %v353
        %v355 = vsel %vm269, %v354, 0.0
        %356 = vadd.xlane.f32.xlu0 %v355
        %v357 = vpop.xlane.xlu0 %356
        %v358 = vmul.f32 %v357, %v351
        %v359 = vadd.f32 %v358, 1e-12
        %v360 = vrsqrt.pop %v359
        %v361 = vmul.f32 %v353, %v360
        %v363 = vlaneseq
        %v364 = vshrl.u32 %v363, 7
        %v365 = vsub.s32 0, %v364
        %v366 = vrot.slane %v261, %v365
        %v368 = vmul.f32 %v361, %v366
        %v370 = vlaneseq
        %v371 = vshrl.u32 %v370, 7
        %v372 = vsub.s32 0, %v371
        %v373 = vrot.slane %v262, %v372
        %v375 = vadd.f32 %v368, %v373
        %376 = vst.msk [vmem:[%s254] sm:$0xff] %vm269, %v375
        %s377 = sand.u32 %s141, 1
        %s378 = scalar_lea.sflag [#allocation4], %s377
        %s379 = sand.u32 %s141, 1
        %s380 = smul.addr %s379, 8
        %s381 = scalar_lea.vmem [#allocation7], %s380
        // Predicated region
        $region49: #{tpu_custom_call.1} parent=39 // pred_check
          %p382 = pneg %p151
        $region50: #{tpu_custom_call.1} parent=39 // pred_check_branch
          %384 = sbr.rel (%p382) target = $region52
        $region51: #{tpu_custom_call.1} parent=39 // pred_region
          %s386 = ssub.s32 128, 128
          %387 = vsyncadd %s378, %s386
          %s388 = smul.addr %s23, 128
          %s389 = scalar_lea.hbm %s5, %s388
          %s391 = sshll.u32 %s381, 4
          %s392 = int_to_ptr.vmem [resolvable:$true] %s391
          %394 = dma.vmem_to_hbm [thread:$0]  %s392, 128, %s389, %s378
        $region52: #{tpu_custom_call.1} parent=39 // pred_fallthru
          _
      $region40: #{tpu_custom_call.1} parent=5 // pred_fallthru
        _
      %p395 = scmp.le.s32.totalorder 2, %s18
      // Predicated region
      $region53: #{tpu_custom_call.1} parent=5 // pred_check
        %p396 = pneg %p395
      $region54: #{tpu_custom_call.1} parent=5 // pred_check_branch
        %398 = sbr.rel (%p396) target = $region56
      $region55: #{tpu_custom_call.1} parent=5 // pred_region
        %s399 = ssub.s32 %s18, 2
        // Predicated region
        $region57: #{tpu_custom_call.1} parent=55 // pred_check
          %p400 = pneg %p157
        $region58: #{tpu_custom_call.1} parent=55 // pred_check_branch
          %402 = sbr.rel (%p400) target = $region60
        $region59: #{tpu_custom_call.1} parent=55 // pred_region
          %s403 = sand.u32 %s142, 1
          %s404 = scalar_lea.sflag [#allocation4], %s403
          %s405 = sand.u32 %s142, 1
          %s406 = smul.addr %s405, 8
          %s407 = scalar_lea.vmem [#allocation7], %s406
          %408 = dma.done %s404, 128
        $region60: #{tpu_custom_call.1} parent=55 // pred_fallthru
          _
      $region56: #{tpu_custom_call.1} parent=5 // pred_fallthru
        _
    $region6: #{tpu_custom_call.1} parent=1 // loop_footer
      %s22 = sadd.s32 1, %s18
    $region7: #{tpu_custom_call.1} parent=1 // loop_footer_branch
      %17 = sbr.rel target = $region3
    $region8: #{tpu_custom_call.1} parent=1 // loop_exit
      _
    %409 = vsyncpa [#allocation3], 1
    %s410 = scalar_lea.sflag [#allocation3], 1
    %411 = vsyncpa %s410, 1
    %412 = vsyncpa [#allocation6], 1
    %413 = vsyncpa [#allocation4], 1
    %s414 = scalar_lea.sflag [#allocation4], 1
    %415 = vsyncpa %s414, 1

</llo_original>
